<compile_context>
chip_gen: v6e
topology: v6e:2x2x1
jax: 0.10.0
libtpu: 0.0.40
codegen_flags: <defaults>
</compile_context>

<pallas_src>
import jax
import jax.numpy as jnp
from jax.experimental import pallas as pl
from jax.experimental.pallas import tpu as pltpu


def _item_scorer_kernel(h_ref, bias_ref, src_ref, dst_ref, out_ref):
    h = h_ref[...]                                   # [N, H] node representations
    n_nodes = h.shape[0]
    n_edges = out_ref.shape[0]

    # One-hot edge-endpoint selectors, built on the VPU (iota + compare).
    node_ids = jax.lax.broadcasted_iota(jnp.int32, (n_edges, n_nodes), 1)
    sel_src = (node_ids == src_ref[...]).astype(jnp.float32)        # [B, N]
    sel_dst = (node_ids == dst_ref[...]).astype(jnp.float32)        # [B, N]

    # Row gathers as MXU matmuls (exact: multiply-by-{0,1} and sum).
    h_src = jnp.dot(sel_src, h, preferred_element_type=jnp.float32)  # [B, H]
    h_dst = jnp.dot(sel_dst, h, preferred_element_type=jnp.float32)  # [B, H]

    # u_dot_v: per-edge inner product of endpoint representations.
    pair_dot = jnp.sum(h_src * h_dst, axis=1, keepdims=True)         # [B, 1]

    # bias_src + bias_dst folded into a single MXU matmul.
    pair_bias = jnp.dot(sel_src + sel_dst, bias_ref[...],
                        preferred_element_type=jnp.float32)          # [B, 1]

    out_ref[...] = pair_dot + pair_bias


def item_to_item_score(h, bias_sub, src_idx, dst_idx):
    """Pair scores for B edges.

    h        : [N, H]  float32  final node representations (3B compacted nodes)
    bias_sub : [N, 1]  float32  learnable bias gathered per subgraph node (= bias[NID])
    src_idx  : [B, 1]  int32    edge source (head) node index within the subgraph
    dst_idx  : [B, 1]  int32    edge destination (tail) node index within the subgraph
    returns  : [B, 1]  float32  pair_score
    """
    n_edges = src_idx.shape[0]
    vmem = pl.BlockSpec(memory_space=pltpu.MemorySpace.VMEM)
    return pl.pallas_call(
        _item_scorer_kernel,
        out_shape=jax.ShapeDtypeStruct((n_edges, 1), jnp.float32),
        in_specs=[vmem, vmem, vmem, vmem],
        out_specs=vmem,
    )(h, bias_sub, src_idx, dst_idx)


if __name__ == "__main__":
    key = jax.random.PRNGKey(0)
    B = 8                  # edges (head -> tail pairs) in the pos/neg subgraph
    N = 3 * B              # compacted subgraph nodes: heads, tails, neg_tails
    H = 32                 # hidden size of the final node representations
    N_FULL = 100           # nodes in the full item graph (size of self.bias)

    k_h, k_b, k_nid, k_dst = jax.random.split(key, 4)

    # Final node representations for the 3B compacted subgraph nodes.
    h = jax.random.normal(k_h, (N, H), jnp.float32)

    # Learnable per-node bias of the full graph.  nn.Parameter(torch.zeros(...))
    # is only the init value; use nonzero values to exercise the bias path.
    bias_full = jax.random.normal(k_b, (N_FULL, 1), jnp.float32)

    # NID: compacted-subgraph node id -> original full-graph node id.
    nids = jax.random.permutation(k_nid, N_FULL)[:N]

    # B head -> tail edges: heads are subgraph nodes 0..B-1, tails in B..2B-1.
    src = jnp.arange(B, dtype=jnp.int32)
    dst = (B + jax.random.randint(k_dst, (B,), 0, B)).astype(jnp.int32)

    # One-time prep (outside the per-forward path): per-subgraph-node bias and
    # kernel-friendly [B, 1] int32 edge-index layout.
    bias_sub = bias_full[nids]                       # [N, 1]
    src_col = src.reshape(B, 1)
    dst_col = dst.reshape(B, 1)

    out = jax.block_until_ready(item_to_item_score(h, bias_sub, src_col, dst_col))
    assert out.shape == (B, 1)

    # Pure-JAX reference (matches the DGL u_dot_v + _add_bias semantics).
    ref = (jnp.sum(h[src] * h[dst], axis=1, keepdims=True)
           + bias_full[nids[src]] + bias_full[nids[dst]])
    assert jnp.allclose(out, ref, atol=1e-4, rtol=1e-4)

    print("KERNEL_OK")
</pallas_src>

<mosaic_0001>
module attributes {stable_mosaic.version = 11 : i64} {
  func.func @_item_scorer_kernel(%arg0: memref<24x32xf32, #tpu.memory_space<vmem>>, %arg1: memref<24x1xf32, #tpu.memory_space<vmem>>, %arg2: memref<8x1xi32, #tpu.memory_space<vmem>>, %arg3: memref<8x1xi32, #tpu.memory_space<vmem>>, %arg4: memref<8x1xf32, #tpu.memory_space<vmem>>) attributes {dimension_semantics = [], scalar_prefetch = 0 : i64, scratch_operands = 0 : i64, tpu.core_type = #tpu.core_type<tc>} {
    %c0 = arith.constant 0 : index
    %c0_0 = arith.constant 0 : index
    %0 = vector.load %arg0[%c0, %c0_0] : memref<24x32xf32, #tpu.memory_space<vmem>>, vector<24x32xf32>
    %1 = tpu.iota {dimensions = array<i32: 1>} : vector<8x24xi32>
    %c0_1 = arith.constant 0 : index
    %c0_2 = arith.constant 0 : index
    %2 = vector.load %arg2[%c0_1, %c0_2] : memref<8x1xi32, #tpu.memory_space<vmem>>, vector<8x1xi32>
    %3 = vector.broadcast %2 : vector<8x1xi32> to vector<8x24xi32>
    %4 = arith.cmpi eq, %1, %3 : vector<8x24xi32>
    %5 = arith.extui %4 : vector<8x24xi1> to vector<8x24xi32>
    %6 = arith.sitofp %5 : vector<8x24xi32> to vector<8x24xf32>
    %c0_3 = arith.constant 0 : index
    %c0_4 = arith.constant 0 : index
    %7 = vector.load %arg3[%c0_3, %c0_4] : memref<8x1xi32, #tpu.memory_space<vmem>>, vector<8x1xi32>
    %8 = vector.broadcast %7 : vector<8x1xi32> to vector<8x24xi32>
    %9 = arith.cmpi eq, %1, %8 : vector<8x24xi32>
    %10 = arith.extui %9 : vector<8x24xi1> to vector<8x24xi32>
    %11 = arith.sitofp %10 : vector<8x24xi32> to vector<8x24xf32>
    %cst = arith.constant dense<0.000000e+00> : vector<8x32xf32>
    %12 = tpu.matmul %6, %0, %cst {dimension_numbers = #tpu.dot_dimension_numbers<[1], [0], [0], [1], [0, 0, 1, 1], [], []>} : vector<8x24xf32>, vector<24x32xf32>, vector<8x32xf32> -> vector<8x32xf32>
    %cst_5 = arith.constant dense<0.000000e+00> : vector<8x32xf32>
    %13 = tpu.matmul %11, %0, %cst_5 {dimension_numbers = #tpu.dot_dimension_numbers<[1], [0], [0], [1], [0, 0, 1, 1], [], []>} : vector<8x24xf32>, vector<24x32xf32>, vector<8x32xf32> -> vector<8x32xf32>
    %14 = arith.mulf %12, %13 : vector<8x32xf32>
    %cst_6 = arith.constant dense<0.000000e+00> : vector<8xf32>
    %15 = vector.multi_reduction <add>, %14, %cst_6 [1] : vector<8x32xf32> to vector<8xf32>
    %16 = vector.shape_cast %15 : vector<8xf32> to vector<8x1xf32>
    %17 = arith.addf %6, %11 : vector<8x24xf32>
    %c0_7 = arith.constant 0 : index
    %c0_8 = arith.constant 0 : index
    %18 = vector.load %arg1[%c0_7, %c0_8] : memref<24x1xf32, #tpu.memory_space<vmem>>, vector<24x1xf32>
    %cst_9 = arith.constant dense<0.000000e+00> : vector<8x1xf32>
    %19 = tpu.matmul %17, %18, %cst_9 {dimension_numbers = #tpu.dot_dimension_numbers<[1], [0], [0], [1], [0, 0, 1, 1], [], []>} : vector<8x24xf32>, vector<24x1xf32>, vector<8x1xf32> -> vector<8x1xf32>
    %20 = arith.addf %16, %19 : vector<8x1xf32>
    %c0_10 = arith.constant 0 : index
    %c0_11 = arith.constant 0 : index
    %21 = vector.load %arg4[%c0_10, %c0_11] : memref<8x1xf32, #tpu.memory_space<vmem>>, vector<8x1xf32>
    tpu.vector_store %arg4[%c0_10, %c0_11], %20 {strides = array<i32>} : memref<8x1xf32, #tpu.memory_space<vmem>>, vector<8x1xf32>,
    return
  }
}

</mosaic_0001>

<llo_original>
// kernel: tpu_custom_call.1
$region0: #{tpu_custom_call.1}
  #allocation0 [shape = 'u32[]', space=smem, size = 0x4, offset = 0x4, fixed_abs, tag = 'smem constant byte address 0x4 - core index']
  #allocation1 [shape = 'u32[144,128]{1,0:T(1,128)}', space=vmem, size = 0x12000, scoped, tag = 'internal scratch']
  %s0 = inlined_call_operand.vmem [shape: f32[24,32], index: 0, kind: input, shape index: {}]
  %s1 = inlined_call_operand.vmem [shape: f32[24,1], index: 1, kind: input, shape index: {}]
  %s2 = inlined_call_operand.vmem [shape: s32[8,1], index: 2, kind: input, shape index: {}]
  %s3 = inlined_call_operand.vmem [shape: s32[8,1], index: 3, kind: input, shape index: {}]
  %s4 = inlined_call_operand.vmem [shape: f32[8,1], index: 4, kind: output, shape index: {}]
  %s5 = sld [smem:[#allocation0]]
  $region26: #{tpu_custom_call.1} parent=0
    _
  %s7 = ssub.s32 1, %s5
  %s8 = scalar_select 0, %s7, %s5
  // Predicated region
  $region2: #{tpu_custom_call.1} parent=0 // pred_check
    _
  $region3: #{tpu_custom_call.1} parent=0 // pred_check_branch
    %10 = sbr.rel (0) target = $region5
  $region4: #{tpu_custom_call.1} parent=0 // pred_region
    _
  $region5: #{tpu_custom_call.1} parent=0 // pred_fallthru
    _
  // Predicated region
  $region6: #{tpu_custom_call.1} parent=0 // pred_check
    _
  $region7: #{tpu_custom_call.1} parent=0 // pred_check_branch
    %12 = sbr.rel (0) target = $region9
  $region8: #{tpu_custom_call.1} parent=0 // pred_region
    _
  $region9: #{tpu_custom_call.1} parent=0 // pred_fallthru
    _
  // Predicated region
  $region10: #{tpu_custom_call.1} parent=0 // pred_check
    _
  $region11: #{tpu_custom_call.1} parent=0 // pred_check_branch
    %14 = sbr.rel (0) target = $region13
  $region12: #{tpu_custom_call.1} parent=0 // pred_region
    _
  $region13: #{tpu_custom_call.1} parent=0 // pred_fallthru
    _
  // Predicated region
  $region14: #{tpu_custom_call.1} parent=0 // pred_check
    _
  $region15: #{tpu_custom_call.1} parent=0 // pred_check_branch
    %16 = sbr.rel (0) target = $region17
  $region16: #{tpu_custom_call.1} parent=0 // pred_region
    _
  $region17: #{tpu_custom_call.1} parent=0 // pred_fallthru
    _
  %v17 = vld [vmem:[%s0] sm:$0xff]
  %v18 = vld [vmem:[%s0 + $0x8] sm:$0xff]
  %v19 = vld [vmem:[%s0 + $0x10] sm:$0xff]
  %v20 = vlaneseq
  %v21 = vand.u32 %v20, 127
  %v22 = vld [vmem:[%s2] sm:$0xff]
  %23 = vset.pattern.permute.xlu0 0
  %24 = vperm.xlu0 %23, %v22
  %v25 = vpop.permute.xlu0 %24
  %vm26 = vcmp.eq.s32.totalorder %v21, %v25
  %v27 = vsel %vm26, 1, 0
  %v28 = vcvt.s32.f32 %v27
  %v29 = vld [vmem:[%s3] sm:$0xff]
  %30 = vset.pattern.permute.xlu0 0
  %31 = vperm.xlu0 %30, %v29
  %v32 = vpop.permute.xlu0 %31
  %vm33 = vcmp.eq.s32.totalorder %v21, %v32
  %v34 = vsel %vm33, 1, 0
  %v35 = vcvt.s32.f32 %v34
  %vm36 = vcmask 195584
  %v38 = vsel %vm36, %v28, 0
  %40 = vmatprep.subr.mxu0 0.0
  %41 = vmatpush1.msra.mxu0 0.0
  %42 = vmatprep.subr.mxu0 0.0
  %43 = vmatpush1.msra.mxu0 0.0
  %44 = vmatprep.subr.mxu0 0.0
  %45 = vmatpush1.msra.mxu0 0.0
  %46 = vmatprep.subr.mxu0 0.0
  %47 = vmatpush1.msra.mxu0 0.0
  %48 = vmatprep.subr.mxu0 0.0
  %49 = vmatpush1.msra.mxu0 0.0
  %50 = vmatprep.subr.mxu0 0.0
  %51 = vmatpush1.msra.mxu0 0.0
  %52 = vmatprep.subr.mxu0 0.0
  %53 = vmatpush1.msra.mxu0 0.0
  %54 = vmatprep.subr.mxu0 0.0
  %55 = vmatpush1.msra.mxu0 0.0
  %56 = vmatprep.subr.mxu0 0.0
  %57 = vmatpush1.msra.mxu0 0.0
  %58 = vmatprep.subr.mxu0 0.0
  %59 = vmatpush1.msra.mxu0 0.0
  %60 = vmatprep.subr.mxu0 0.0
  %61 = vmatpush1.msra.mxu0 0.0
  %62 = vmatprep.subr.mxu0 0.0
  %63 = vmatpush1.msra.mxu0 0.0
  %64 = vmatprep.subr.mxu0 0.0
  %65 = vmatpush1.msra.mxu0 0.0
  %66 = vmatprep.subr.mxu0 0.0
  %67 = vmatpush1.msra.mxu0 %v19
  %68 = vmatprep.subr.mxu0 0.0
  %69 = vmatpush1.msra.mxu0 %v18
  %70 = vmatprep.subr.mxu0 0.0
  %71 = vmatpush1.msra.mxu0 %v17
  %72 = vmatprep.subr.mxu0 0.0
  %73 = vmatpush2.msra.mxu0 0.0
  %74 = vmatprep.subr.mxu0 0.0
  %75 = vmatpush2.msra.mxu0 0.0
  %76 = vmatprep.subr.mxu0 0.0
  %77 = vmatpush2.msra.mxu0 0.0
  %78 = vmatprep.subr.mxu0 0.0
  %79 = vmatpush2.msra.mxu0 0.0
  %80 = vmatprep.subr.mxu0 0.0
  %81 = vmatpush2.msra.mxu0 0.0
  %82 = vmatprep.subr.mxu0 0.0
  %83 = vmatpush2.msra.mxu0 0.0
  %84 = vmatprep.subr.mxu0 0.0
  %85 = vmatpush2.msra.mxu0 0.0
  %86 = vmatprep.subr.mxu0 0.0
  %87 = vmatpush2.msra.mxu0 0.0
  %88 = vmatprep.subr.mxu0 0.0
  %89 = vmatpush2.msra.mxu0 0.0
  %90 = vmatprep.subr.mxu0 0.0
  %91 = vmatpush2.msra.mxu0 0.0
  %92 = vmatprep.subr.mxu0 0.0
  %93 = vmatpush2.msra.mxu0 0.0
  %94 = vmatprep.subr.mxu0 0.0
  %95 = vmatpush2.msra.mxu0 0.0
  %96 = vmatprep.subr.mxu0 0.0
  %97 = vmatpush2.msra.mxu0 0.0
  %98 = vmatprep.subr.mxu0 0.0
  %99 = vmatpush2.msra.mxu0 0.0
  %100 = vmatprep.subr.mxu0 0.0
  %101 = vmatpush2.msra.mxu0 0.0
  %102 = vmatprep.subr.mxu0 0.0
  %103 = vmatpush2.msra.mxu0 0.0
  %104 = vmatprep.mubr.f32.mxu0 0.0
  %105 = vmatmul.mubr.f32.gmra.mxu0 %v38
  %v106 = vpop.f32.mrf.mxu0
  %v107 = vadd.f32 0.0, %v106
  %v108 = vpop.f32.mrf.mxu0
  %109 = vdwg.mxu0
  %v111 = vsel %vm36, %v35, 0
  %113 = vmatprep.subr.mxu0 0.0
  %114 = vmatpush1.msra.mxu0 0.0
  %115 = vmatprep.subr.mxu0 0.0
  %116 = vmatpush1.msra.mxu0 0.0
  %117 = vmatprep.subr.mxu0 0.0
  %118 = vmatpush1.msra.mxu0 0.0
  %119 = vmatprep.subr.mxu0 0.0
  %120 = vmatpush1.msra.mxu0 0.0
  %121 = vmatprep.subr.mxu0 0.0
  %122 = vmatpush1.msra.mxu0 0.0
  %123 = vmatprep.subr.mxu0 0.0
  %124 = vmatpush1.msra.mxu0 0.0
  %125 = vmatprep.subr.mxu0 0.0
  %126 = vmatpush1.msra.mxu0 0.0
  %127 = vmatprep.subr.mxu0 0.0
  %128 = vmatpush1.msra.mxu0 0.0
  %129 = vmatprep.subr.mxu0 0.0
  %130 = vmatpush1.msra.mxu0 0.0
  %131 = vmatprep.subr.mxu0 0.0
  %132 = vmatpush1.msra.mxu0 0.0
  %133 = vmatprep.subr.mxu0 0.0
  %134 = vmatpush1.msra.mxu0 0.0
  %135 = vmatprep.subr.mxu0 0.0
  %136 = vmatpush1.msra.mxu0 0.0
  %137 = vmatprep.subr.mxu0 0.0
  %138 = vmatpush1.msra.mxu0 0.0
  %139 = vmatprep.subr.mxu0 0.0
  %140 = vmatpush1.msra.mxu0 %v19
  %141 = vmatprep.subr.mxu0 0.0
  %142 = vmatpush1.msra.mxu0 %v18
  %143 = vmatprep.subr.mxu0 0.0
  %144 = vmatpush1.msra.mxu0 %v17
  %145 = vmatprep.subr.mxu0 0.0
  %146 = vmatpush2.msra.mxu0 0.0
  %147 = vmatprep.subr.mxu0 0.0
  %148 = vmatpush2.msra.mxu0 0.0
  %149 = vmatprep.subr.mxu0 0.0
  %150 = vmatpush2.msra.mxu0 0.0
  %151 = vmatprep.subr.mxu0 0.0
  %152 = vmatpush2.msra.mxu0 0.0
  %153 = vmatprep.subr.mxu0 0.0
  %154 = vmatpush2.msra.mxu0 0.0
  %155 = vmatprep.subr.mxu0 0.0
  %156 = vmatpush2.msra.mxu0 0.0
  %157 = vmatprep.subr.mxu0 0.0
  %158 = vmatpush2.msra.mxu0 0.0
  %159 = vmatprep.subr.mxu0 0.0
  %160 = vmatpush2.msra.mxu0 0.0
  %161 = vmatprep.subr.mxu0 0.0
  %162 = vmatpush2.msra.mxu0 0.0
  %163 = vmatprep.subr.mxu0 0.0
  %164 = vmatpush2.msra.mxu0 0.0
  %165 = vmatprep.subr.mxu0 0.0
  %166 = vmatpush2.msra.mxu0 0.0
  %167 = vmatprep.subr.mxu0 0.0
  %168 = vmatpush2.msra.mxu0 0.0
  %169 = vmatprep.subr.mxu0 0.0
  %170 = vmatpush2.msra.mxu0 0.0
  %171 = vmatprep.subr.mxu0 0.0
  %172 = vmatpush2.msra.mxu0 0.0
  %173 = vmatprep.subr.mxu0 0.0
  %174 = vmatpush2.msra.mxu0 0.0
  %175 = vmatprep.subr.mxu0 0.0
  %176 = vmatpush2.msra.mxu0 0.0
  %177 = vmatprep.mubr.f32.mxu0 0.0
  %178 = vmatmul.mubr.f32.gmra.mxu0 %v111
  %v179 = vpop.f32.mrf.mxu0
  %v180 = vadd.f32 0.0, %v179
  %v181 = vpop.f32.mrf.mxu0
  %182 = vdwg.mxu0
  %v183 = vmul.f32 %v107, %v180
  %vm184 = vcmask 261120
  %v185 = vsel %vm184, %v183, 0.0
  %186 = vadd.xlane.f32.xlu0 %v185
  %v187 = vpop.xlane.xlu0 %186
  %v188 = vadd.f32 %v28, %v35
  %v189 = vld [vmem:[%s1] sm:$0xff]
  %v190 = vld [vmem:[%s1 + $0x8] sm:$0xff]
  %v191 = vld [vmem:[%s1 + $0x10] sm:$0xff]
  %v193 = vsel %vm36, %v188, 0
  %195 = vmatprep.subr.mxu0 0.0
  %196 = vmatpush1.msra.mxu0 0.0
  %197 = vmatprep.subr.mxu0 0.0
  %198 = vmatpush1.msra.mxu0 0.0
  %199 = vmatprep.subr.mxu0 0.0
  %200 = vmatpush1.msra.mxu0 0.0
  %201 = vmatprep.subr.mxu0 0.0
  %202 = vmatpush1.msra.mxu0 0.0
  %203 = vmatprep.subr.mxu0 0.0
  %204 = vmatpush1.msra.mxu0 0.0
  %205 = vmatprep.subr.mxu0 0.0
  %206 = vmatpush1.msra.mxu0 0.0
  %207 = vmatprep.subr.mxu0 0.0
  %208 = vmatpush1.msra.mxu0 0.0
  %209 = vmatprep.subr.mxu0 0.0
  %210 = vmatpush1.msra.mxu0 0.0
  %211 = vmatprep.subr.mxu0 0.0
  %212 = vmatpush1.msra.mxu0 0.0
  %213 = vmatprep.subr.mxu0 0.0
  %214 = vmatpush1.msra.mxu0 0.0
  %215 = vmatprep.subr.mxu0 0.0
  %216 = vmatpush1.msra.mxu0 0.0
  %217 = vmatprep.subr.mxu0 0.0
  %218 = vmatpush1.msra.mxu0 0.0
  %219 = vmatprep.subr.mxu0 0.0
  %220 = vmatpush1.msra.mxu0 0.0
  %221 = vmatprep.subr.mxu0 0.0
  %222 = vmatpush1.msra.mxu0 %v191
  %223 = vmatprep.subr.mxu0 0.0
  %224 = vmatpush1.msra.mxu0 %v190
  %225 = vmatprep.subr.mxu0 0.0
  %226 = vmatpush1.msra.mxu0 %v189
  %227 = vmatprep.subr.mxu0 0.0
  %228 = vmatpush2.msra.mxu0 0.0
  %229 = vmatprep.subr.mxu0 0.0
  %230 = vmatpush2.msra.mxu0 0.0
  %231 = vmatprep.subr.mxu0 0.0
  %232 = vmatpush2.msra.mxu0 0.0
  %233 = vmatprep.subr.mxu0 0.0
  %234 = vmatpush2.msra.mxu0 0.0
  %235 = vmatprep.subr.mxu0 0.0
  %236 = vmatpush2.msra.mxu0 0.0
  %237 = vmatprep.subr.mxu0 0.0
  %238 = vmatpush2.msra.mxu0 0.0
  %239 = vmatprep.subr.mxu0 0.0
  %240 = vmatpush2.msra.mxu0 0.0
  %241 = vmatprep.subr.mxu0 0.0
  %242 = vmatpush2.msra.mxu0 0.0
  %243 = vmatprep.subr.mxu0 0.0
  %244 = vmatpush2.msra.mxu0 0.0
  %245 = vmatprep.subr.mxu0 0.0
  %246 = vmatpush2.msra.mxu0 0.0
  %247 = vmatprep.subr.mxu0 0.0
  %248 = vmatpush2.msra.mxu0 0.0
  %249 = vmatprep.subr.mxu0 0.0
  %250 = vmatpush2.msra.mxu0 0.0
  %251 = vmatprep.subr.mxu0 0.0
  %252 = vmatpush2.msra.mxu0 0.0
  %253 = vmatprep.subr.mxu0 0.0
  %254 = vmatpush2.msra.mxu0 0.0
  %255 = vmatprep.subr.mxu0 0.0
  %256 = vmatpush2.msra.mxu0 0.0
  %257 = vmatprep.subr.mxu0 0.0
  %258 = vmatpush2.msra.mxu0 0.0
  %259 = vmatprep.mubr.f32.mxu0 0.0
  %260 = vmatmul.mubr.f32.gmra.mxu0 %v193
  %v261 = vpop.f32.mrf.mxu0
  %v262 = vadd.f32 0.0, %v261
  %v263 = vpop.f32.mrf.mxu0
  %264 = vdwg.mxu0
  %v265 = vadd.f32 %v187, %v262
  %vm266 = vcmask 7168
  %267 = vst.msk [vmem:[%s4] sm:$0xff] %vm266, %v265
  // Predicated region
  $region18: #{tpu_custom_call.1} parent=0 // pred_check
    _
  $region19: #{tpu_custom_call.1} parent=0 // pred_check_branch
    %269 = sbr.rel (0) target = $region21
  $region20: #{tpu_custom_call.1} parent=0 // pred_region
    _
  $region21: #{tpu_custom_call.1} parent=0 // pred_fallthru
    _
  // Predicated region
  $region22: #{tpu_custom_call.1} parent=0 // pred_check
    _
  $region23: #{tpu_custom_call.1} parent=0 // pred_check_branch
    %271 = sbr.rel (0) target = $region25
  $region24: #{tpu_custom_call.1} parent=0 // pred_region
    _
  $region25: #{tpu_custom_call.1} parent=0 // pred_fallthru
    _

</llo_original>
